<compile_context>
chip_gen: v7x
topology: tpu7x:2x2x1
jax: 0.10.0
libtpu: 0.0.40
codegen_flags: <defaults>
</compile_context>

<pallas_src>
import functools

import jax
import jax.numpy as jnp
from jax import lax
from jax.experimental import pallas as pl
from jax.experimental.pallas import tpu as pltpu

_LANE = 128


def _round_up(n, m):
    return ((n + m - 1) // m) * m


# ----------------------------------------------------------------------------
# In-kernel helpers
# ----------------------------------------------------------------------------
def _chunk_softmax(logits, masks, valid):
    """Masked softmax over each hierarchy chunk with ONE full-width exp.

    maxmap[:, j] holds the max of column j's own chunk, so exp(logits - maxmap)
    never overflows.  Padded lanes (valid == False) carry exactly-zero logits
    (zero-padded weights / biases) and are forced to 0.  The divide uses the
    EUP approx reciprocal (~1e-3 relative error on the chunk normalization).
    """
    neg = jnp.float32(-1e30)
    maxmap = jnp.zeros_like(logits)
    for m in masks:
        cmax = jnp.max(jnp.where(m, logits, neg), axis=-1, keepdims=True)
        maxmap = jnp.where(m, cmax, maxmap)
    e = jnp.where(valid, jnp.exp(logits - maxmap), 0.0)
    summap = jnp.ones_like(logits)  # 1.0 in padded lanes keeps the recip finite
    for m in masks:
        csum = jnp.sum(jnp.where(m, e, 0.0), axis=-1, keepdims=True)
        summap = jnp.where(m, csum, summap)
    return e * pl.reciprocal(summap, approx=True)


def _hmcnf_kernel(*refs, hierarchy, h_pad, beta, if_global, mm_dtype):
    L = len(hierarchy)
    it = iter(refs)
    x_ref, wx_ref, bg_ref = next(it), next(it), next(it)
    wg_ref = next(it) if L > 1 else None
    wla_ref, bla_ref, wlb_ref, blb_ref = next(it), next(it), next(it), next(it)
    wag_ref = bag_ref = None
    if if_global:
        wag_ref, bag_ref = next(it), next(it)
    out_ref = next(it)

    bt = x_ref.shape[0]
    Lp = blb_ref.shape[-1]

    # Hoisted chunk masks: built once, shared by both softmaxes.
    col = lax.broadcasted_iota(jnp.int32, (bt, Lp), 1)
    masks, cum = [], 0
    for h in hierarchy:
        masks.append((col >= cum) & (col < cum + h))
        cum += h
    valid = col < cum

    # ---- global chain (concat-free), local branch interleaved per level ----
    # One matmul for ALL per-level x-projections (x arrives as bf16).
    xproj = jnp.dot(x_ref[...], wx_ref[...],
                    preferred_element_type=jnp.float32) + bg_ref[...]

    ploc_logits = jnp.zeros((bt, Lp), jnp.float32)
    g = jnp.maximum(xproj[:, 0:h_pad], 0.0)
    g_mm = g.astype(mm_dtype)
    for i in range(L):
        if i > 0:
            gg = jnp.dot(g_mm, wg_ref[:, (i - 1) * h_pad:i * h_pad],
                         preferred_element_type=jnp.float32)
            g = jnp.maximum(xproj[:, i * h_pad:(i + 1) * h_pad] + gg, 0.0)
            g_mm = g.astype(mm_dtype)
        # Per-level local branch fused into the chain: no block-diagonal
        # matmul waste, no scratch store/reload of the g activations.
        h1 = jnp.maximum(
            jnp.dot(g_mm, wla_ref[:, i * h_pad:(i + 1) * h_pad],
                    preferred_element_type=jnp.float32)
            + bla_ref[:, i * h_pad:(i + 1) * h_pad], 0.0)
        ploc_logits = ploc_logits + jnp.dot(
            h1.astype(mm_dtype), wlb_ref[i * h_pad:(i + 1) * h_pad, :],
            preferred_element_type=jnp.float32)
    # TODO(synk): nn.Dropout omitted (inference / eval semantics -> identity).
    p_loc = _chunk_softmax(ploc_logits + blb_ref[...], masks, valid)

    if if_global:
        pglob_logits = jnp.dot(g_mm, wag_ref[...],
                               preferred_element_type=jnp.float32) + bag_ref[...]
        p_glob = _chunk_softmax(pglob_logits, masks, valid)
        out = (1.0 - beta) * p_glob + beta * p_loc
    else:
        out = p_loc
    out_ref[...] = out.astype(out_ref.dtype)


# ----------------------------------------------------------------------------
# Host-side parameter init / packing
# ----------------------------------------------------------------------------
def init_params(key, features_size, hidden_size, hierarchy):
    """Deterministic init mirroring torch.nn.Linear default (U(-1/sqrt(in), ..))."""
    label_size = sum(hierarchy)
    params = {}

    def linear_init(k, din, dout):
        k1, k2 = jax.random.split(k)
        bound = 1.0 / (din ** 0.5)
        w = jax.random.uniform(k1, (din, dout), jnp.float32, -bound, bound)
        b = jax.random.uniform(k2, (dout,), jnp.float32, -bound, bound)
        return w, b

    n_layers = 3 * len(hierarchy) + 1
    keys = jax.random.split(key, n_layers)
    ki = 0
    for i in range(len(hierarchy)):
        din = features_size if i == 0 else features_size + hidden_size
        params[f"gw{i}"], params[f"gb{i}"] = linear_init(keys[ki], din, hidden_size)
        ki += 1
    for i in range(len(hierarchy)):
        params[f"lw{i}a"], params[f"lb{i}a"] = linear_init(keys[ki], hidden_size, hidden_size)
        ki += 1
        params[f"lw{i}b"], params[f"lb{i}b"] = linear_init(keys[ki], hidden_size, hierarchy[i])
        ki += 1
    params["agw"], params["agb"] = linear_init(keys[ki], hidden_size, label_size)
    return params


def pack_params(params, features_size, hidden_size, hierarchy,
                mm_dtype=jnp.bfloat16):
    """Zero-pad to lane multiples of 128, split the concat-weights into their
    g- and x-parts, lay the per-level local weights out as lane-contiguous
    slabs (no block-diagonal), and cast matmul operands to mm_dtype (biases
    stay f32)."""
    L = len(hierarchy)
    label_size = sum(hierarchy)
    F, H = features_size, hidden_size
    Fp = _round_up(F, _LANE)
    Hp = _round_up(H, _LANE)
    Lp = _round_up(label_size, _LANE)

    wx = jnp.zeros((Fp, L * Hp), jnp.float32)       # x-part of every gw{i}
    bg = jnp.zeros((1, L * Hp), jnp.float32)
    wg = jnp.zeros((Hp, (L - 1) * Hp), jnp.float32) if L > 1 else None
    wla = jnp.zeros((Hp, L * Hp), jnp.float32)      # per-level lw{i}a slabs
    bla = jnp.zeros((1, L * Hp), jnp.float32)
    wlb = jnp.zeros((L * Hp, Lp), jnp.float32)      # per-level lw{i}b -> label cols
    blb = jnp.zeros((1, Lp), jnp.float32)
    wag = jnp.zeros((Hp, Lp), jnp.float32)
    bag = jnp.zeros((1, Lp), jnp.float32)

    cum = 0
    for i in range(L):
        gwi = params[f"gw{i}"]  # (F, H) if i == 0 else (H + F, H); concat order [g, x]
        if i == 0:
            wx = wx.at[:F, 0:H].set(gwi)
        else:
            wg = wg.at[:H, (i - 1) * Hp:(i - 1) * Hp + H].set(gwi[:H, :])
            wx = wx.at[:F, i * Hp:i * Hp + H].set(gwi[H:, :])
        bg = bg.at[0, i * Hp:i * Hp + H].set(params[f"gb{i}"])

        wla = wla.at[:H, i * Hp:i * Hp + H].set(params[f"lw{i}a"])
        bla = bla.at[0, i * Hp:i * Hp + H].set(params[f"lb{i}a"])
        hi = hierarchy[i]
        wlb = wlb.at[i * Hp:i * Hp + H, cum:cum + hi].set(params[f"lw{i}b"])
        blb = blb.at[0, cum:cum + hi].set(params[f"lb{i}b"])
        cum += hi

    wag = wag.at[:H, :label_size].set(params["agw"])
    bag = bag.at[0, :label_size].set(params["agb"])

    packed = {
        "wx": wx.astype(mm_dtype), "bg": bg,
        "wla": wla.astype(mm_dtype), "bla": bla,
        "wlb": wlb.astype(mm_dtype), "blb": blb,
        "wag": wag.astype(mm_dtype), "bag": bag,
    }
    if L > 1:
        packed["wg"] = wg.astype(mm_dtype)
    return packed


# ----------------------------------------------------------------------------
# Forward wrapper
# ----------------------------------------------------------------------------
def hmcnf_forward(x, packed, hierarchy, *, features_size, hidden_size,
                  beta=0.5, if_global=True, mm_dtype=jnp.bfloat16,
                  batch_tile=256):
    """Matches HMCNFModel.forward with if_mask=False, dropout in eval mode."""
    B, F = x.shape
    assert F == features_size
    L = len(hierarchy)
    label_size = sum(hierarchy)
    Fp = _round_up(F, _LANE)
    Hp = _round_up(hidden_size, _LANE)
    Lp = _round_up(label_size, _LANE)

    # Batch tile: multiple of 16 (bf16 sublane pack).  Ensure >= 2 grid steps
    # when the batch allows it so both v7x TensorCores get work.
    bt = min(_round_up(B, 16), batch_tile)
    if B >= 32 and _round_up(B, bt) // bt < 2:
        bt = _round_up((B + 1) // 2, 16)
    Bp = _round_up(B, bt)

    # Host-side bf16 cast fused with the padding; skip the pad when aligned.
    if Bp == B and Fp == F:
        xp = x.astype(mm_dtype)
    else:
        xp = jnp.zeros((Bp, Fp), mm_dtype).at[:B, :F].set(x.astype(mm_dtype))

    kernel = functools.partial(
        _hmcnf_kernel, hierarchy=tuple(hierarchy), h_pad=Hp, beta=float(beta),
        if_global=if_global, mm_dtype=mm_dtype)

    # Grid-invariant weights/biases: whole-array, single-buffered VMEM
    # residency (no double-buffering of constant blocks).
    vmem_spec = pl.BlockSpec(memory_space=pltpu.MemorySpace.VMEM)
    args = [xp, packed["wx"], packed["bg"]]
    in_specs = [pl.BlockSpec((bt, Fp), lambda i: (i, 0)), vmem_spec, vmem_spec]
    if L > 1:
        args.append(packed["wg"])
        in_specs.append(vmem_spec)
    args += [packed["wla"], packed["bla"], packed["wlb"], packed["blb"]]
    in_specs += [vmem_spec] * 4
    if if_global:
        args += [packed["wag"], packed["bag"]]
        in_specs += [vmem_spec, vmem_spec]

    # Explicit VMEM budget: single-buffered weights + double-buffered x/out
    # tiles + in-kernel working set, with headroom.  Capped at the smallest
    # physical VMEM across generations (v7x: 64 MiB).
    weight_bytes = sum(int(a.size) * int(a.dtype.itemsize) for a in args[1:])
    stream_bytes = 2 * bt * Fp * jnp.dtype(mm_dtype).itemsize + 2 * bt * Lp * 4
    work_bytes = 4 * bt * (2 * L * Hp + 6 * Hp + 16 * Lp)
    vmem_limit = int(1.5 * (weight_bytes + stream_bytes + work_bytes)) + (4 << 20)
    vmem_limit = max(min(vmem_limit, 64 << 20), 8 << 20)

    out = pl.pallas_call(
        kernel,
        out_shape=jax.ShapeDtypeStruct((Bp, Lp), jnp.float32),
        grid=(Bp // bt,),
        in_specs=in_specs,
        out_specs=pl.BlockSpec((bt, Lp), lambda i: (i, 0)),
        compiler_params=pltpu.CompilerParams(
            dimension_semantics=("parallel",),
            vmem_limit_bytes=vmem_limit),
    )(*args)
    # TODO(synk): if_mask branch (argmax-driven per-row masking) not implemented;
    # default if_mask=False matches the reference module's default path.
    return out[:B, :label_size]


# ----------------------------------------------------------------------------
# Pure-JAX reference (f32) for the correctness check
# ----------------------------------------------------------------------------
def reference_forward(x, params, hierarchy, beta=0.5):
    def lin(a, w, b):
        return jnp.dot(a, w, precision=lax.Precision.HIGHEST) + b

    g = []
    for i in range(len(hierarchy)):
        inp = x if i == 0 else jnp.concatenate([g[-1], x], axis=1)
        g.append(jax.nn.relu(lin(inp, params[f"gw{i}"], params[f"gb{i}"])))
    locs = []
    for i in range(len(hierarchy)):
        h1 = jax.nn.relu(lin(g[i], params[f"lw{i}a"], params[f"lb{i}a"]))
        locs.append(jax.nn.softmax(lin(h1, params[f"lw{i}b"], params[f"lb{i}b"]), axis=-1))
    p_loc = jnp.concatenate(locs, axis=1)
    p_glob = lin(g[-1], params["agw"], params["agb"])
    pieces, cum = [], 0
    for h in hierarchy:
        pieces.append(jax.nn.softmax(p_glob[:, cum:cum + h], axis=-1))
        cum += h
    p_glob_sm = jnp.concatenate(pieces, axis=1)
    return (1.0 - beta) * p_glob_sm + beta * p_loc


# ----------------------------------------------------------------------------
if __name__ == "__main__":
    batch = 8
    features_size = 32
    hidden_size = 32
    hierarchy = [4, 8]                                # label_size = 12
    h_specific = [[[0, 1], [2, 3], [4, 5], [6, 7]]]   # only used when if_mask=True
    beta = 0.5

    key = jax.random.PRNGKey(0)
    kx, kp = jax.random.split(key)
    x = jax.random.normal(kx, (batch, features_size), dtype=jnp.float32)
    params = init_params(kp, features_size, hidden_size, hierarchy)
    packed = pack_params(params, features_size, hidden_size, hierarchy)

    fwd = jax.jit(functools.partial(
        hmcnf_forward, hierarchy=hierarchy, features_size=features_size,
        hidden_size=hidden_size, beta=beta, if_global=True))
    labels = jax.block_until_ready(fwd(x, packed))

    ref = jax.block_until_ready(reference_forward(x, params, hierarchy, beta=beta))
    assert labels.shape == (batch, sum(hierarchy))
    max_err = float(jnp.max(jnp.abs(labels - ref)))
    assert max_err < 1e-2, f"mismatch vs reference: {max_err}"

    print("KERNEL_OK")
</pallas_src>

<mosaic_0001>
module attributes {stable_mosaic.version = 11 : i64} {
  func.func @_hmcnf_kernel(%arg0: i32, %arg1: memref<16x128xbf16, #tpu.memory_space<vmem>>, %arg2: memref<128x256xbf16, #tpu.memory_space<vmem>>, %arg3: memref<1x256xf32, #tpu.memory_space<vmem>>, %arg4: memref<128x128xbf16, #tpu.memory_space<vmem>>, %arg5: memref<128x256xbf16, #tpu.memory_space<vmem>>, %arg6: memref<1x256xf32, #tpu.memory_space<vmem>>, %arg7: memref<256x128xbf16, #tpu.memory_space<vmem>>, %arg8: memref<1x128xf32, #tpu.memory_space<vmem>>, %arg9: memref<128x128xbf16, #tpu.memory_space<vmem>>, %arg10: memref<1x128xf32, #tpu.memory_space<vmem>>, %arg11: memref<16x128xf32, #tpu.memory_space<vmem>>) attributes {dimension_semantics = [#tpu.dimension_semantics<parallel>], iteration_bounds = array<i64: 1>, scalar_prefetch = 0 : i64, scratch_operands = 0 : i64, tpu.core_type = #tpu.core_type<tc>, window_params = [{transform_indices = @transform_0, window_bounds = array<i64: 16, 128>}, {pipeline_mode = #tpu.pipeline_mode<synchronous>, transform_indices = @transform_1, window_bounds = array<i64: 128, 256>}, {pipeline_mode = #tpu.pipeline_mode<synchronous>, transform_indices = @transform_2, window_bounds = array<i64: 1, 256>}, {pipeline_mode = #tpu.pipeline_mode<synchronous>, transform_indices = @transform_3, window_bounds = array<i64: 128, 128>}, {pipeline_mode = #tpu.pipeline_mode<synchronous>, transform_indices = @transform_4, window_bounds = array<i64: 128, 256>}, {pipeline_mode = #tpu.pipeline_mode<synchronous>, transform_indices = @transform_5, window_bounds = array<i64: 1, 256>}, {pipeline_mode = #tpu.pipeline_mode<synchronous>, transform_indices = @transform_6, window_bounds = array<i64: 256, 128>}, {pipeline_mode = #tpu.pipeline_mode<synchronous>, transform_indices = @transform_7, window_bounds = array<i64: 1, 128>}, {pipeline_mode = #tpu.pipeline_mode<synchronous>, transform_indices = @transform_8, window_bounds = array<i64: 128, 128>}, {pipeline_mode = #tpu.pipeline_mode<synchronous>, transform_indices = @transform_9, window_bounds = array<i64: 1, 128>}, {transform_indices = @transform_10, window_bounds = array<i64: 16, 128>}]} {
    %0 = tpu.iota {dimensions = array<i32: 1>} : vector<16x128xi32>
    %c0_i32 = arith.constant 0 : i32
    %1 = vector.broadcast %c0_i32 : i32 to vector<16x128xi32>
    %2 = arith.cmpi sge, %0, %1 : vector<16x128xi32>
    %c4_i32 = arith.constant 4 : i32
    %3 = vector.broadcast %c4_i32 : i32 to vector<16x128xi32>
    %4 = arith.cmpi slt, %0, %3 : vector<16x128xi32>
    %5 = arith.andi %2, %4 : vector<16x128xi1>
    %c4_i32_0 = arith.constant 4 : i32
    %6 = vector.broadcast %c4_i32_0 : i32 to vector<16x128xi32>
    %7 = arith.cmpi sge, %0, %6 : vector<16x128xi32>
    %c12_i32 = arith.constant 12 : i32
    %8 = vector.broadcast %c12_i32 : i32 to vector<16x128xi32>
    %9 = arith.cmpi slt, %0, %8 : vector<16x128xi32>
    %10 = arith.andi %7, %9 : vector<16x128xi1>
    %c12_i32_1 = arith.constant 12 : i32
    %11 = vector.broadcast %c12_i32_1 : i32 to vector<16x128xi32>
    %12 = arith.cmpi slt, %0, %11 : vector<16x128xi32>
    %c0 = arith.constant 0 : index
    %c0_2 = arith.constant 0 : index
    %13 = vector.load %arg1[%c0, %c0_2] : memref<16x128xbf16, #tpu.memory_space<vmem>>, vector<16x128xbf16>
    %c0_3 = arith.constant 0 : index
    %c0_4 = arith.constant 0 : index
    %14 = vector.load %arg2[%c0_3, %c0_4] : memref<128x256xbf16, #tpu.memory_space<vmem>>, vector<128x256xbf16>
    %cst = arith.constant dense<0.000000e+00> : vector<16x256xf32>
    %15 = tpu.matmul %13, %14, %cst {dimension_numbers = #tpu.dot_dimension_numbers<[1], [0], [0], [1], [0, 0, 1, 1], [], []>} : vector<16x128xbf16>, vector<128x256xbf16>, vector<16x256xf32> -> vector<16x256xf32>
    %c0_5 = arith.constant 0 : index
    %c0_6 = arith.constant 0 : index
    %16 = vector.load %arg3[%c0_5, %c0_6] : memref<1x256xf32, #tpu.memory_space<vmem>>, vector<1x256xf32>
    %17 = vector.broadcast %16 : vector<1x256xf32> to vector<16x256xf32>
    %18 = arith.addf %15, %17 : vector<16x256xf32>
    %cst_7 = arith.constant 0.000000e+00 : f32
    %19 = vector.broadcast %cst_7 : f32 to vector<16x128xf32>
    %20 = vector.extract_strided_slice %18 {offsets = [0, 0], sizes = [16, 128], strides = [1, 1]} : vector<16x256xf32> to vector<16x128xf32>
    %cst_8 = arith.constant 0.000000e+00 : f32
    %21 = vector.broadcast %cst_8 : f32 to vector<16x128xf32>
    %22 = arith.maximumf %20, %21 : vector<16x128xf32>
    %23 = arith.truncf %22 : vector<16x128xf32> to vector<16x128xbf16>
    %c0_9 = arith.constant 0 : index
    %c0_10 = arith.constant 0 : index
    %24 = vector.load %arg5[%c0_9, %c0_10] : memref<128x256xbf16, #tpu.memory_space<vmem>>, vector<128x128xbf16>
    %cst_11 = arith.constant dense<0.000000e+00> : vector<16x128xf32>
    %25 = tpu.matmul %23, %24, %cst_11 {dimension_numbers = #tpu.dot_dimension_numbers<[1], [0], [0], [1], [0, 0, 1, 1], [], []>} : vector<16x128xbf16>, vector<128x128xbf16>, vector<16x128xf32> -> vector<16x128xf32>
    %c0_12 = arith.constant 0 : index
    %c0_13 = arith.constant 0 : index
    %26 = vector.load %arg6[%c0_12, %c0_13] : memref<1x256xf32, #tpu.memory_space<vmem>>, vector<1x128xf32>
    %27 = vector.broadcast %26 : vector<1x128xf32> to vector<16x128xf32>
    %28 = arith.addf %25, %27 : vector<16x128xf32>
    %cst_14 = arith.constant 0.000000e+00 : f32
    %29 = vector.broadcast %cst_14 : f32 to vector<16x128xf32>
    %30 = arith.maximumf %28, %29 : vector<16x128xf32>
    %31 = arith.truncf %30 : vector<16x128xf32> to vector<16x128xbf16>
    %c0_15 = arith.constant 0 : index
    %c0_16 = arith.constant 0 : index
    %32 = vector.load %arg7[%c0_15, %c0_16] : memref<256x128xbf16, #tpu.memory_space<vmem>>, vector<128x128xbf16>
    %cst_17 = arith.constant dense<0.000000e+00> : vector<16x128xf32>
    %33 = tpu.matmul %31, %32, %cst_17 {dimension_numbers = #tpu.dot_dimension_numbers<[1], [0], [0], [1], [0, 0, 1, 1], [], []>} : vector<16x128xbf16>, vector<128x128xbf16>, vector<16x128xf32> -> vector<16x128xf32>
    %34 = arith.addf %19, %33 : vector<16x128xf32>
    %c0_18 = arith.constant 0 : index
    %c0_19 = arith.constant 0 : index
    %35 = vector.load %arg4[%c0_18, %c0_19] : memref<128x128xbf16, #tpu.memory_space<vmem>>, vector<128x128xbf16>
    %cst_20 = arith.constant dense<0.000000e+00> : vector<16x128xf32>
    %36 = tpu.matmul %23, %35, %cst_20 {dimension_numbers = #tpu.dot_dimension_numbers<[1], [0], [0], [1], [0, 0, 1, 1], [], []>} : vector<16x128xbf16>, vector<128x128xbf16>, vector<16x128xf32> -> vector<16x128xf32>
    %37 = vector.extract_strided_slice %18 {offsets = [0, 128], sizes = [16, 128], strides = [1, 1]} : vector<16x256xf32> to vector<16x128xf32>
    %38 = arith.addf %37, %36 : vector<16x128xf32>
    %cst_21 = arith.constant 0.000000e+00 : f32
    %39 = vector.broadcast %cst_21 : f32 to vector<16x128xf32>
    %40 = arith.maximumf %38, %39 : vector<16x128xf32>
    %41 = arith.truncf %40 : vector<16x128xf32> to vector<16x128xbf16>
    %c0_22 = arith.constant 0 : index
    %c128 = arith.constant 128 : index
    %42 = vector.load %arg5[%c0_22, %c128] : memref<128x256xbf16, #tpu.memory_space<vmem>>, vector<128x128xbf16>
    %cst_23 = arith.constant dense<0.000000e+00> : vector<16x128xf32>
    %43 = tpu.matmul %41, %42, %cst_23 {dimension_numbers = #tpu.dot_dimension_numbers<[1], [0], [0], [1], [0, 0, 1, 1], [], []>} : vector<16x128xbf16>, vector<128x128xbf16>, vector<16x128xf32> -> vector<16x128xf32>
    %c0_24 = arith.constant 0 : index
    %c128_25 = arith.constant 128 : index
    %44 = vector.load %arg6[%c0_24, %c128_25] : memref<1x256xf32, #tpu.memory_space<vmem>>, vector<1x128xf32>
    %45 = vector.broadcast %44 : vector<1x128xf32> to vector<16x128xf32>
    %46 = arith.addf %43, %45 : vector<16x128xf32>
    %cst_26 = arith.constant 0.000000e+00 : f32
    %47 = vector.broadcast %cst_26 : f32 to vector<16x128xf32>
    %48 = arith.maximumf %46, %47 : vector<16x128xf32>
    %49 = arith.truncf %48 : vector<16x128xf32> to vector<16x128xbf16>
    %c128_27 = arith.constant 128 : index
    %c0_28 = arith.constant 0 : index
    %50 = vector.load %arg7[%c128_27, %c0_28] : memref<256x128xbf16, #tpu.memory_space<vmem>>, vector<128x128xbf16>
    %cst_29 = arith.constant dense<0.000000e+00> : vector<16x128xf32>
    %51 = tpu.matmul %49, %50, %cst_29 {dimension_numbers = #tpu.dot_dimension_numbers<[1], [0], [0], [1], [0, 0, 1, 1], [], []>} : vector<16x128xbf16>, vector<128x128xbf16>, vector<16x128xf32> -> vector<16x128xf32>
    %52 = arith.addf %34, %51 : vector<16x128xf32>
    %c0_30 = arith.constant 0 : index
    %c0_31 = arith.constant 0 : index
    %53 = vector.load %arg8[%c0_30, %c0_31] : memref<1x128xf32, #tpu.memory_space<vmem>>, vector<1x128xf32>
    %54 = vector.broadcast %53 : vector<1x128xf32> to vector<16x128xf32>
    %55 = arith.addf %52, %54 : vector<16x128xf32>
    %cst_32 = arith.constant 0.000000e+00 : f32
    %56 = vector.broadcast %cst_32 : f32 to vector<16x128xf32>
    %cst_33 = arith.constant -1.000000e+30 : f32
    %57 = vector.broadcast %cst_33 : f32 to vector<16x128xf32>
    %58 = arith.select %5, %55, %57 : vector<16x128xi1>, vector<16x128xf32>
    %cst_34 = arith.constant dense<0xFF800000> : vector<16xf32>
    %59 = vector.multi_reduction <maximumf>, %58, %cst_34 [1] : vector<16x128xf32> to vector<16xf32>
    %60 = vector.shape_cast %59 : vector<16xf32> to vector<16x1xf32>
    %61 = vector.shape_cast %60 : vector<16x1xf32> to vector<16x1xf32>
    %62 = vector.broadcast %61 : vector<16x1xf32> to vector<16x128xf32>
    %63 = arith.select %5, %62, %56 : vector<16x128xi1>, vector<16x128xf32>
    %cst_35 = arith.constant -1.000000e+30 : f32
    %64 = vector.broadcast %cst_35 : f32 to vector<16x128xf32>
    %65 = arith.select %10, %55, %64 : vector<16x128xi1>, vector<16x128xf32>
    %cst_36 = arith.constant dense<0xFF800000> : vector<16xf32>
    %66 = vector.multi_reduction <maximumf>, %65, %cst_36 [1] : vector<16x128xf32> to vector<16xf32>
    %67 = vector.shape_cast %66 : vector<16xf32> to vector<16x1xf32>
    %68 = vector.shape_cast %67 : vector<16x1xf32> to vector<16x1xf32>
    %69 = vector.broadcast %68 : vector<16x1xf32> to vector<16x128xf32>
    %70 = arith.select %10, %69, %63 : vector<16x128xi1>, vector<16x128xf32>
    %71 = arith.subf %55, %70 : vector<16x128xf32>
    %72 = math.exp %71 : vector<16x128xf32>
    %cst_37 = arith.constant 0.000000e+00 : f32
    %73 = vector.broadcast %cst_37 : f32 to vector<16x128xf32>
    %74 = arith.select %12, %72, %73 : vector<16x128xi1>, vector<16x128xf32>
    %cst_38 = arith.constant 1.000000e+00 : f32
    %75 = vector.broadcast %cst_38 : f32 to vector<16x128xf32>
    %cst_39 = arith.constant 0.000000e+00 : f32
    %76 = vector.broadcast %cst_39 : f32 to vector<16x128xf32>
    %77 = arith.select %5, %74, %76 : vector<16x128xi1>, vector<16x128xf32>
    %cst_40 = arith.constant dense<0.000000e+00> : vector<16xf32>
    %78 = vector.multi_reduction <add>, %77, %cst_40 [1] : vector<16x128xf32> to vector<16xf32>
    %79 = vector.shape_cast %78 : vector<16xf32> to vector<16x1xf32>
    %80 = vector.shape_cast %79 : vector<16x1xf32> to vector<16x1xf32>
    %81 = vector.broadcast %80 : vector<16x1xf32> to vector<16x128xf32>
    %82 = arith.select %5, %81, %75 : vector<16x128xi1>, vector<16x128xf32>
    %cst_41 = arith.constant 0.000000e+00 : f32
    %83 = vector.broadcast %cst_41 : f32 to vector<16x128xf32>
    %84 = arith.select %10, %74, %83 : vector<16x128xi1>, vector<16x128xf32>
    %cst_42 = arith.constant dense<0.000000e+00> : vector<16xf32>
    %85 = vector.multi_reduction <add>, %84, %cst_42 [1] : vector<16x128xf32> to vector<16xf32>
    %86 = vector.shape_cast %85 : vector<16xf32> to vector<16x1xf32>
    %87 = vector.shape_cast %86 : vector<16x1xf32> to vector<16x1xf32>
    %88 = vector.broadcast %87 : vector<16x1xf32> to vector<16x128xf32>
    %89 = arith.select %10, %88, %82 : vector<16x128xi1>, vector<16x128xf32>
    %90 = tpu.reciprocal %89 {approx = true} : vector<16x128xf32> -> vector<16x128xf32>
    %91 = arith.mulf %74, %90 : vector<16x128xf32>
    %c0_43 = arith.constant 0 : index
    %c0_44 = arith.constant 0 : index
    %92 = vector.load %arg9[%c0_43, %c0_44] : memref<128x128xbf16, #tpu.memory_space<vmem>>, vector<128x128xbf16>
    %cst_45 = arith.constant dense<0.000000e+00> : vector<16x128xf32>
    %93 = tpu.matmul %41, %92, %cst_45 {dimension_numbers = #tpu.dot_dimension_numbers<[1], [0], [0], [1], [0, 0, 1, 1], [], []>} : vector<16x128xbf16>, vector<128x128xbf16>, vector<16x128xf32> -> vector<16x128xf32>
    %c0_46 = arith.constant 0 : index
    %c0_47 = arith.constant 0 : index
    %94 = vector.load %arg10[%c0_46, %c0_47] : memref<1x128xf32, #tpu.memory_space<vmem>>, vector<1x128xf32>
    %95 = vector.broadcast %94 : vector<1x128xf32> to vector<16x128xf32>
    %96 = arith.addf %93, %95 : vector<16x128xf32>
    %cst_48 = arith.constant 0.000000e+00 : f32
    %97 = vector.broadcast %cst_48 : f32 to vector<16x128xf32>
    %cst_49 = arith.constant -1.000000e+30 : f32
    %98 = vector.broadcast %cst_49 : f32 to vector<16x128xf32>
    %99 = arith.select %5, %96, %98 : vector<16x128xi1>, vector<16x128xf32>
    %cst_50 = arith.constant dense<0xFF800000> : vector<16xf32>
    %100 = vector.multi_reduction <maximumf>, %99, %cst_50 [1] : vector<16x128xf32> to vector<16xf32>
    %101 = vector.shape_cast %100 : vector<16xf32> to vector<16x1xf32>
    %102 = vector.shape_cast %101 : vector<16x1xf32> to vector<16x1xf32>
    %103 = vector.broadcast %102 : vector<16x1xf32> to vector<16x128xf32>
    %104 = arith.select %5, %103, %97 : vector<16x128xi1>, vector<16x128xf32>
    %cst_51 = arith.constant -1.000000e+30 : f32
    %105 = vector.broadcast %cst_51 : f32 to vector<16x128xf32>
    %106 = arith.select %10, %96, %105 : vector<16x128xi1>, vector<16x128xf32>
    %cst_52 = arith.constant dense<0xFF800000> : vector<16xf32>
    %107 = vector.multi_reduction <maximumf>, %106, %cst_52 [1] : vector<16x128xf32> to vector<16xf32>
    %108 = vector.shape_cast %107 : vector<16xf32> to vector<16x1xf32>
    %109 = vector.shape_cast %108 : vector<16x1xf32> to vector<16x1xf32>
    %110 = vector.broadcast %109 : vector<16x1xf32> to vector<16x128xf32>
    %111 = arith.select %10, %110, %104 : vector<16x128xi1>, vector<16x128xf32>
    %112 = arith.subf %96, %111 : vector<16x128xf32>
    %113 = math.exp %112 : vector<16x128xf32>
    %cst_53 = arith.constant 0.000000e+00 : f32
    %114 = vector.broadcast %cst_53 : f32 to vector<16x128xf32>
    %115 = arith.select %12, %113, %114 : vector<16x128xi1>, vector<16x128xf32>
    %cst_54 = arith.constant 1.000000e+00 : f32
    %116 = vector.broadcast %cst_54 : f32 to vector<16x128xf32>
    %cst_55 = arith.constant 0.000000e+00 : f32
    %117 = vector.broadcast %cst_55 : f32 to vector<16x128xf32>
    %118 = arith.select %5, %115, %117 : vector<16x128xi1>, vector<16x128xf32>
    %cst_56 = arith.constant dense<0.000000e+00> : vector<16xf32>
    %119 = vector.multi_reduction <add>, %118, %cst_56 [1] : vector<16x128xf32> to vector<16xf32>
    %120 = vector.shape_cast %119 : vector<16xf32> to vector<16x1xf32>
    %121 = vector.shape_cast %120 : vector<16x1xf32> to vector<16x1xf32>
    %122 = vector.broadcast %121 : vector<16x1xf32> to vector<16x128xf32>
    %123 = arith.select %5, %122, %116 : vector<16x128xi1>, vector<16x128xf32>
    %cst_57 = arith.constant 0.000000e+00 : f32
    %124 = vector.broadcast %cst_57 : f32 to vector<16x128xf32>
    %125 = arith.select %10, %115, %124 : vector<16x128xi1>, vector<16x128xf32>
    %cst_58 = arith.constant dense<0.000000e+00> : vector<16xf32>
    %126 = vector.multi_reduction <add>, %125, %cst_58 [1] : vector<16x128xf32> to vector<16xf32>
    %127 = vector.shape_cast %126 : vector<16xf32> to vector<16x1xf32>
    %128 = vector.shape_cast %127 : vector<16x1xf32> to vector<16x1xf32>
    %129 = vector.broadcast %128 : vector<16x1xf32> to vector<16x128xf32>
    %130 = arith.select %10, %129, %123 : vector<16x128xi1>, vector<16x128xf32>
    %131 = tpu.reciprocal %130 {approx = true} : vector<16x128xf32> -> vector<16x128xf32>
    %132 = arith.mulf %115, %131 : vector<16x128xf32>
    %cst_59 = arith.constant 5.000000e-01 : f32
    %133 = vector.broadcast %cst_59 : f32 to vector<16x128xf32>
    %134 = arith.mulf %133, %132 : vector<16x128xf32>
    %cst_60 = arith.constant 5.000000e-01 : f32
    %135 = vector.broadcast %cst_60 : f32 to vector<16x128xf32>
    %136 = arith.mulf %135, %91 : vector<16x128xf32>
    %137 = arith.addf %134, %136 : vector<16x128xf32>
    %c0_61 = arith.constant 0 : index
    %c0_62 = arith.constant 0 : index
    %138 = vector.load %arg11[%c0_61, %c0_62] : memref<16x128xf32, #tpu.memory_space<vmem>>, vector<16x128xf32>
    tpu.vector_store %arg11[%c0_61, %c0_62], %137 {strides = array<i32>} : memref<16x128xf32, #tpu.memory_space<vmem>>, vector<16x128xf32>,
    return
  }
  func.func @transform_0(%arg0: i32) -> (i32, i32) {
    %c0_i32 = arith.constant 0 : i32
    %c0_i32_0 = arith.constant 0 : i32
    return %arg0, %c0_i32 : i32, i32
  }
  func.func @transform_1(%arg0: i32) -> (i32, i32) {
    %c0_i32 = arith.constant 0 : i32
    %c0_i32_0 = arith.constant 0 : i32
    %c0_i32_1 = arith.constant 0 : i32
    return %c0_i32, %c0_i32_0 : i32, i32
  }
  func.func @transform_2(%arg0: i32) -> (i32, i32) {
    %c0_i32 = arith.constant 0 : i32
    %c0_i32_0 = arith.constant 0 : i32
    %c0_i32_1 = arith.constant 0 : i32
    return %c0_i32, %c0_i32_0 : i32, i32
  }
  func.func @transform_3(%arg0: i32) -> (i32, i32) {
    %c0_i32 = arith.constant 0 : i32
    %c0_i32_0 = arith.constant 0 : i32
    %c0_i32_1 = arith.constant 0 : i32
    return %c0_i32, %c0_i32_0 : i32, i32
  }
  func.func @transform_4(%arg0: i32) -> (i32, i32) {
    %c0_i32 = arith.constant 0 : i32
    %c0_i32_0 = arith.constant 0 : i32
    %c0_i32_1 = arith.constant 0 : i32
    return %c0_i32, %c0_i32_0 : i32, i32
  }
  func.func @transform_5(%arg0: i32) -> (i32, i32) {
    %c0_i32 = arith.constant 0 : i32
    %c0_i32_0 = arith.constant 0 : i32
    %c0_i32_1 = arith.constant 0 : i32
    return %c0_i32, %c0_i32_0 : i32, i32
  }
  func.func @transform_6(%arg0: i32) -> (i32, i32) {
    %c0_i32 = arith.constant 0 : i32
    %c0_i32_0 = arith.constant 0 : i32
    %c0_i32_1 = arith.constant 0 : i32
    return %c0_i32, %c0_i32_0 : i32, i32
  }
  func.func @transform_7(%arg0: i32) -> (i32, i32) {
    %c0_i32 = arith.constant 0 : i32
    %c0_i32_0 = arith.constant 0 : i32
    %c0_i32_1 = arith.constant 0 : i32
    return %c0_i32, %c0_i32_0 : i32, i32
  }
  func.func @transform_8(%arg0: i32) -> (i32, i32) {
    %c0_i32 = arith.constant 0 : i32
    %c0_i32_0 = arith.constant 0 : i32
    %c0_i32_1 = arith.constant 0 : i32
    return %c0_i32, %c0_i32_0 : i32, i32
  }
  func.func @transform_9(%arg0: i32) -> (i32, i32) {
    %c0_i32 = arith.constant 0 : i32
    %c0_i32_0 = arith.constant 0 : i32
    %c0_i32_1 = arith.constant 0 : i32
    return %c0_i32, %c0_i32_0 : i32, i32
  }
  func.func @transform_10(%arg0: i32) -> (i32, i32) {
    %c0_i32 = arith.constant 0 : i32
    %c0_i32_0 = arith.constant 0 : i32
    return %arg0, %c0_i32 : i32, i32
  }
}

</mosaic_0001>

<llo_original>
// kernel: hmcnf_forward.1
$region0: #{hmcnf_forward.1}
  #allocation0 [shape = 'u32[]', space=smem, size = 0x4, offset = 0x4, fixed_abs, tag = 'smem constant byte address 0x4 - core index']
  #allocation1 [shape = 'u32[144,128]{1,0:T(1,128)}', space=vmem, size = 0x12000, scoped, tag = 'internal scratch']
  %s0 = inlined_call_operand.vmem [shape: bf16[16,128], index: 0, kind: input, shape index: {}]
  %s1 = inlined_call_operand.hbm [shape: bf16[128,256], index: 1, kind: input, shape index: {}]
  %s2 = inlined_call_operand.vmem [shape: f32[1,256], index: 2, kind: input, shape index: {}]
  %s3 = inlined_call_operand.hbm [shape: bf16[128,128], index: 3, kind: input, shape index: {}]
  %s4 = inlined_call_operand.hbm [shape: bf16[128,256], index: 4, kind: input, shape index: {}]
  %s5 = inlined_call_operand.vmem [shape: f32[1,256], index: 5, kind: input, shape index: {}]
  %s6 = inlined_call_operand.hbm [shape: bf16[256,128], index: 6, kind: input, shape index: {}]
  %s7 = inlined_call_operand.vmem [shape: f32[1,128], index: 7, kind: input, shape index: {}]
  %s8 = inlined_call_operand.hbm [shape: bf16[128,128], index: 8, kind: input, shape index: {}]
  %s9 = inlined_call_operand.vmem [shape: f32[1,128], index: 9, kind: input, shape index: {}]
  %s10 = inlined_call_operand.vmem [shape: f32[16,128], index: 10, kind: output, shape index: {}]
  %s11 = sld [smem:[#allocation0]]
  $region70: #{hmcnf_forward.1} parent=0
    _
  %s13 = ssub.s32 1, %s11
  %s14 = scalar_select 0, %s13, %s11
  $region1: #{hmcnf_forward.1} parent=0
    #allocation2 [shape = 'u8[65536]{0}', space=vmem, size = 0x10000, scoped, tag = 'input window, operand 1, single buffered']
    #allocation3 [shape = 's32[1]{0}', space=sflag, size = 0x4, scoped, tag = 'scoped memory for hmcnf_forward.1']
    #allocation4 [shape = 'u8[32768]{0}', space=vmem, size = 0x8000, scoped, tag = 'input window, operand 3, single buffered']
    #allocation5 [shape = 's32[1]{0}', space=sflag, size = 0x4, scoped, tag = 'scoped memory for hmcnf_forward.1']
    #allocation6 [shape = 'u8[65536]{0}', space=vmem, size = 0x10000, scoped, tag = 'input window, operand 4, single buffered']
    #allocation7 [shape = 'u8[65536]{0}', space=vmem, size = 0x10000, scoped, tag = 'input window, operand 6, single buffered']
    #allocation8 [shape = 's32[1]{0}', space=sflag, size = 0x4, scoped, tag = 'scoped memory for hmcnf_forward.1']
    #allocation9 [shape = 'u8[32768]{0}', space=vmem, size = 0x8000, scoped, tag = 'input window, operand 8, single buffered']
    %15 = vsyncpa [#allocation3], 0
    %16 = vsyncpa [#allocation5], 0
    %17 = vsyncpa [#allocation8], 0
    // Predicated region
    $region2: #{hmcnf_forward.1} parent=1 // pred_check
      _
    $region3: #{hmcnf_forward.1} parent=1 // pred_check_branch
      %19 = sbr.rel (0) target = $region5
    $region4: #{hmcnf_forward.1} parent=1 // pred_region
      _
    $region5: #{hmcnf_forward.1} parent=1 // pred_fallthru
      _
    // Predicated region
    $region6: #{hmcnf_forward.1} parent=1 // pred_check
      _
    $region7: #{hmcnf_forward.1} parent=1 // pred_check_branch
      %21 = sbr.rel (0) target = $region9
    $region8: #{hmcnf_forward.1} parent=1 // pred_region
      %s23 = ssub.s32 2048, 2048
      %24 = vsyncadd [#allocation3], %s23
      %s25 = sshll.u32 [#allocation2], 4
      %s26 = int_to_ptr.vmem [resolvable:$true] %s25
      %31 = dma.hbm_to_vmem [thread:$0]  %s1, 2048, %s26, [#allocation3], 128, 128, 8
    $region9: #{hmcnf_forward.1} parent=1 // pred_fallthru
      _
    // Predicated region
    $region10: #{hmcnf_forward.1} parent=1 // pred_check
      _
    $region11: #{hmcnf_forward.1} parent=1 // pred_check_branch
      %33 = sbr.rel (0) target = $region13
    $region12: #{hmcnf_forward.1} parent=1 // pred_region
      _
    $region13: #{hmcnf_forward.1} parent=1 // pred_fallthru
      _
    // Predicated region
    $region14: #{hmcnf_forward.1} parent=1 // pred_check
      _
    $region15: #{hmcnf_forward.1} parent=1 // pred_check_branch
      %35 = sbr.rel (0) target = $region17
    $region16: #{hmcnf_forward.1} parent=1 // pred_region
      %s37 = ssub.s32 1024, 1024
      %38 = vsyncadd [#allocation5], %s37
      %s39 = sshll.u32 [#allocation4], 4
      %s40 = int_to_ptr.vmem [resolvable:$true] %s39
      %45 = dma.hbm_to_vmem [thread:$0]  %s3, 1024, %s40, [#allocation5], 64, 64, 4
    $region17: #{hmcnf_forward.1} parent=1 // pred_fallthru
      _
    // Predicated region
    $region18: #{hmcnf_forward.1} parent=1 // pred_check
      _
    $region19: #{hmcnf_forward.1} parent=1 // pred_check_branch
      %47 = sbr.rel (0) target = $region21
    $region20: #{hmcnf_forward.1} parent=1 // pred_region
      %s49 = ssub.s32 2048, 2048
      %50 = vsyncadd [#allocation5], %s49
      %s51 = sshll.u32 [#allocation6], 4
      %s52 = int_to_ptr.vmem [resolvable:$true] %s51
      %57 = dma.hbm_to_vmem [thread:$0]  %s4, 2048, %s52, [#allocation5], 128, 128, 8
    $region21: #{hmcnf_forward.1} parent=1 // pred_fallthru
      _
    // Predicated region
    $region22: #{hmcnf_forward.1} parent=1 // pred_check
      _
    $region23: #{hmcnf_forward.1} parent=1 // pred_check_branch
      %59 = sbr.rel (0) target = $region25
    $region24: #{hmcnf_forward.1} parent=1 // pred_region
      _
    $region25: #{hmcnf_forward.1} parent=1 // pred_fallthru
      _
    // Predicated region
    $region26: #{hmcnf_forward.1} parent=1 // pred_check
      _
    $region27: #{hmcnf_forward.1} parent=1 // pred_check_branch
      %61 = sbr.rel (0) target = $region29
    $region28: #{hmcnf_forward.1} parent=1 // pred_region
      %s63 = ssub.s32 2048, 2048
      %64 = vsyncadd [#allocation8], %s63
      %s65 = sshll.u32 [#allocation7], 4
      %s66 = int_to_ptr.vmem [resolvable:$true] %s65
      %71 = dma.hbm_to_vmem [thread:$0]  %s6, 2048, %s66, [#allocation8], 64, 64, 4
    $region29: #{hmcnf_forward.1} parent=1 // pred_fallthru
      _
    // Predicated region
    $region30: #{hmcnf_forward.1} parent=1 // pred_check
      _
    $region31: #{hmcnf_forward.1} parent=1 // pred_check_branch
      %73 = sbr.rel (0) target = $region33
    $region32: #{hmcnf_forward.1} parent=1 // pred_region
      _
    $region33: #{hmcnf_forward.1} parent=1 // pred_fallthru
      _
    // Predicated region
    $region34: #{hmcnf_forward.1} parent=1 // pred_check
      _
    $region35: #{hmcnf_forward.1} parent=1 // pred_check_branch
      %75 = sbr.rel (0) target = $region37
    $region36: #{hmcnf_forward.1} parent=1 // pred_region
      %s77 = ssub.s32 1024, 1024
      %78 = vsyncadd [#allocation8], %s77
      %s79 = sshll.u32 [#allocation9], 4
      %s80 = int_to_ptr.vmem [resolvable:$true] %s79
      %85 = dma.hbm_to_vmem [thread:$0]  %s8, 1024, %s80, [#allocation8], 64, 64, 4
    $region37: #{hmcnf_forward.1} parent=1 // pred_fallthru
      _
    // Predicated region
    $region38: #{hmcnf_forward.1} parent=1 // pred_check
      _
    $region39: #{hmcnf_forward.1} parent=1 // pred_check_branch
      %87 = sbr.rel (0) target = $region41
    $region40: #{hmcnf_forward.1} parent=1 // pred_region
      _
    $region41: #{hmcnf_forward.1} parent=1 // pred_fallthru
      _
    // Predicated region
    $region42: #{hmcnf_forward.1} parent=1 // pred_check
      _
    $region43: #{hmcnf_forward.1} parent=1 // pred_check_branch
      %89 = sbr.rel (0) target = $region45
    $region44: #{hmcnf_forward.1} parent=1 // pred_region
      %90 = dma.done [#allocation3], 2048
    $region45: #{hmcnf_forward.1} parent=1 // pred_fallthru
      _
    // Predicated region
    $region46: #{hmcnf_forward.1} parent=1 // pred_check
      _
    $region47: #{hmcnf_forward.1} parent=1 // pred_check_branch
      %92 = sbr.rel (0) target = $region49
    $region48: #{hmcnf_forward.1} parent=1 // pred_region
      %93 = dma.done [#allocation5], 1024
    $region49: #{hmcnf_forward.1} parent=1 // pred_fallthru
      _
    // Predicated region
    $region50: #{hmcnf_forward.1} parent=1 // pred_check
      _
    $region51: #{hmcnf_forward.1} parent=1 // pred_check_branch
      %95 = sbr.rel (0) target = $region53
    $region52: #{hmcnf_forward.1} parent=1 // pred_region
      %96 = dma.done [#allocation5], 2048
    $region53: #{hmcnf_forward.1} parent=1 // pred_fallthru
      _
    // Predicated region
    $region54: #{hmcnf_forward.1} parent=1 // pred_check
      _
    $region55: #{hmcnf_forward.1} parent=1 // pred_check_branch
      %98 = sbr.rel (0) target = $region57
    $region56: #{hmcnf_forward.1} parent=1 // pred_region
      %99 = dma.done [#allocation8], 2048
    $region57: #{hmcnf_forward.1} parent=1 // pred_fallthru
      _
    // Predicated region
    $region58: #{hmcnf_forward.1} parent=1 // pred_check
      _
    $region59: #{hmcnf_forward.1} parent=1 // pred_check_branch
      %101 = sbr.rel (0) target = $region61
    $region60: #{hmcnf_forward.1} parent=1 // pred_region
      %102 = dma.done [#allocation8], 1024
    $region61: #{hmcnf_forward.1} parent=1 // pred_fallthru
      _
    %v104 = vlaneseq
    %v105 = vand.u32 %v104, 127
    %vm106 = vcmp.ge.s32.totalorder %v105, 0
    %vm107 = vcmp.lt.s32.totalorder %v105, 4
    %vm108 = vmand %vm106, %vm107
    %vm109 = vcmp.ge.s32.totalorder %v105, 4
    %vm110 = vcmp.lt.s32.totalorder %v105, 12
    %vm111 = vmand %vm109, %vm110
    %v112 = vld [vmem:[%s0] sm:$0xf]
    %v113 = vld [vmem:[%s0 + $0x4] sm:$0xf]
    %v114 = vld [vmem:[#allocation2] sm:$0xff]
    %v115 = vld [vmem:[#allocation2 + $0x8] sm:$0xff]
    %v116 = vld [vmem:[#allocation2 + $0x10] sm:$0xff]
    %v117 = vld [vmem:[#allocation2 + $0x18] sm:$0xff]
    %v118 = vld [vmem:[#allocation2 + $0x20] sm:$0xff]
    %v119 = vld [vmem:[#allocation2 + $0x28] sm:$0xff]
    %v120 = vld [vmem:[#allocation2 + $0x30] sm:$0xff]
    %v121 = vld [vmem:[#allocation2 + $0x38] sm:$0xff]
    %v122 = vld [vmem:[#allocation2 + $0x40] sm:$0xff]
    %v123 = vld [vmem:[#allocation2 + $0x48] sm:$0xff]
    %v124 = vld [vmem:[#allocation2 + $0x50] sm:$0xff]
    %v125 = vld [vmem:[#allocation2 + $0x58] sm:$0xff]
    %v126 = vld [vmem:[#allocation2 + $0x60] sm:$0xff]
    %v127 = vld [vmem:[#allocation2 + $0x68] sm:$0xff]
    %v128 = vld [vmem:[#allocation2 + $0x70] sm:$0xff]
    %v129 = vld [vmem:[#allocation2 + $0x78] sm:$0xff]
    %v130 = vld [vmem:[%s2] sm:$0x3]
    %v132 = vlaneseq
    %v133 = vshrl.u32 %v132, 7
    %v134 = vsub.s32 0, %v133
    %v135 = vrot.slane %v130, %v134
    %v136 = vlaneseq
    %v137 = vshrl.u32 %v136, 7
    %v138 = vsub.s32 1, %v137
    %v139 = vrot.slane %v130, %v138
    %v144 = vunpack.c.l.b16 %v112
    %v145 = vunpack.c.l.b16 %v113
    %v146 = vpack.c.b16 %v145, %v144
    %v164 = vunpack.c.l.b16 %v114
    %v165 = vunpack.c.h.b16 %v114
    %v166 = vunpack.c.l.b16 %v115
    %v167 = vunpack.c.h.b16 %v115
    %v168 = vunpack.c.l.b16 %v116
    %v169 = vunpack.c.h.b16 %v116
    %v170 = vunpack.c.l.b16 %v117
    %v171 = vunpack.c.h.b16 %v117
    %v172 = vunpack.c.l.b16 %v118
    %v173 = vunpack.c.h.b16 %v118
    %v174 = vunpack.c.l.b16 %v119
    %v175 = vunpack.c.h.b16 %v119
    %v176 = vunpack.c.l.b16 %v120
    %v177 = vunpack.c.h.b16 %v120
    %v178 = vunpack.c.l.b16 %v121
    %v179 = vunpack.c.h.b16 %v121
    %v180 = vunpack.c.l.b16 %v122
    %v181 = vunpack.c.h.b16 %v122
    %v182 = vunpack.c.l.b16 %v123
    %v183 = vunpack.c.h.b16 %v123
    %v184 = vunpack.c.l.b16 %v124
    %v185 = vunpack.c.h.b16 %v124
    %v186 = vunpack.c.l.b16 %v125
    %v187 = vunpack.c.h.b16 %v125
    %v188 = vunpack.c.l.b16 %v126
    %v189 = vunpack.c.h.b16 %v126
    %v190 = vunpack.c.l.b16 %v127
    %v191 = vunpack.c.h.b16 %v127
    %v192 = vunpack.c.l.b16 %v128
    %v193 = vunpack.c.h.b16 %v128
    %v194 = vunpack.c.l.b16 %v129
    %v195 = vunpack.c.h.b16 %v129
    %v196 = vpack.c.b16 %v166, %v164
    %v197 = vpack.c.b16 %v167, %v165
    %v198 = vpack.c.b16 %v170, %v168
    %v199 = vpack.c.b16 %v171, %v169
    %v200 = vpack.c.b16 %v174, %v172
    %v201 = vpack.c.b16 %v175, %v173
    %v202 = vpack.c.b16 %v178, %v176
    %v203 = vpack.c.b16 %v179, %v177
    %v204 = vpack.c.b16 %v182, %v180
    %v205 = vpack.c.b16 %v183, %v181
    %v206 = vpack.c.b16 %v186, %v184
    %v207 = vpack.c.b16 %v187, %v185
    %v208 = vpack.c.b16 %v190, %v188
    %v209 = vpack.c.b16 %v191, %v189
    %v210 = vpack.c.b16 %v194, %v192
    %v211 = vpack.c.b16 %v195, %v193
    %228 = vmatprep.subr.bf16.mxu0 %v197
    %229 = vmatpush1.bf16.msra.mxu0 %v196
    %230 = vmatprep.subr.bf16.mxu0 %v199
    %231 = vmatpush1.bf16.msra.mxu0 %v198
    %232 = vmatprep.subr.bf16.mxu0 %v201
    %233 = vmatpush1.bf16.msra.mxu0 %v200
    %234 = vmatprep.subr.bf16.mxu0 %v203
    %235 = vmatpush1.bf16.msra.mxu0 %v202
    %236 = vmatprep.subr.bf16.mxu0 %v205
    %237 = vmatpush1.bf16.msra.mxu0 %v204
    %238 = vmatprep.subr.bf16.mxu0 %v207
    %239 = vmatpush1.bf16.msra.mxu0 %v206
    %240 = vmatprep.subr.bf16.mxu0 %v209
    %241 = vmatpush1.bf16.msra.mxu0 %v208
    %242 = vmatprep.subr.bf16.mxu0 %v211
    %243 = vmatpush1.bf16.msra.mxu0 %v210
    %244 = vmatprep.subr.bf16.mxu0 0
    %245 = vmatpush1.bf16.msra.mxu0 0
    %246 = vmatprep.subr.bf16.mxu0 0
    %247 = vmatpush1.bf16.msra.mxu0 0
    %248 = vmatprep.subr.bf16.mxu0 0
    %249 = vmatpush1.bf16.msra.mxu0 0
    %250 = vmatprep.subr.bf16.mxu0 0
    %251 = vmatpush1.bf16.msra.mxu0 0
    %252 = vmatprep.subr.bf16.mxu0 0
    %253 = vmatpush1.bf16.msra.mxu0 0
    %254 = vmatprep.subr.bf16.mxu0 0
    %255 = vmatpush1.bf16.msra.mxu0 0
    %256 = vmatprep.subr.bf16.mxu0 0
    %257 = vmatpush1.bf16.msra.mxu0 0
    %258 = vmatprep.subr.bf16.mxu0 0
    %259 = vmatpush1.bf16.msra.mxu0 0
    %260 = vmatprep.mubr.bf16.mxu0 0
    %261 = vmatmul.mubr.bf16.gmra.mrb[0].mxu0 %v146
    %v262 = vpop.f32.mrb[0].mxu0
    %v263 = vadd.f32 %v135, %v262
    %v264 = vpop.f32.mrb[0].mxu0
    %v265 = vadd.f32 %v139, %v264
    %v266 = vpop.f32.mrb[0].mxu0
    %v267 = vadd.f32 %v135, %v266
    %v268 = vpop.f32.mrb[0].mxu0
    %v269 = vadd.f32 %v139, %v268
    %270 = vdwg.mxu0
    %v271 = vmax.f32 %v263, 0.0
    %v272 = vmax.f32 %v267, 0.0
    %v273 = vpack.c.bf16 %v272, %v271
    %v274 = vld [vmem:[#allocation6] sm:$0xf]
    %v275 = vld [vmem:[#allocation6 + $0x8] sm:$0xf]
    %v276 = vld [vmem:[#allocation6 + $0x10] sm:$0xf]
    %v277 = vld [vmem:[#allocation6 + $0x18] sm:$0xf]
    %v278 = vld [vmem:[#allocation6 + $0x20] sm:$0xf]
    %v279 = vld [vmem:[#allocation6 + $0x28] sm:$0xf]
    %v280 = vld [vmem:[#allocation6 + $0x30] sm:$0xf]
    %v281 = vld [vmem:[#allocation6 + $0x38] sm:$0xf]
    %v282 = vld [vmem:[#allocation6 + $0x40] sm:$0xf]
    %v283 = vld [vmem:[#allocation6 + $0x48] sm:$0xf]
    %v284 = vld [vmem:[#allocation6 + $0x50] sm:$0xf]
    %v285 = vld [vmem:[#allocation6 + $0x58] sm:$0xf]
    %v286 = vld [vmem:[#allocation6 + $0x60] sm:$0xf]
    %v287 = vld [vmem:[#allocation6 + $0x68] sm:$0xf]
    %v288 = vld [vmem:[#allocation6 + $0x70] sm:$0xf]
    %v289 = vld [vmem:[#allocation6 + $0x78] sm:$0xf]
    %v290 = vld [vmem:[%s5] sm:$0x1]
    %v292 = vlaneseq
    %v293 = vshrl.u32 %v292, 7
    %v294 = vsub.s32 0, %v293
    %v295 = vrot.slane %v290, %v294
    %v313 = vunpack.c.l.b16 %v274
    %v314 = vunpack.c.l.b16 %v275
    %v315 = vunpack.c.l.b16 %v276
    %v316 = vunpack.c.l.b16 %v277
    %v317 = vunpack.c.l.b16 %v278
    %v318 = vunpack.c.l.b16 %v279
    %v319 = vunpack.c.l.b16 %v280
    %v320 = vunpack.c.l.b16 %v281
    %v321 = vunpack.c.l.b16 %v282
    %v322 = vunpack.c.l.b16 %v283
    %v323 = vunpack.c.l.b16 %v284
    %v324 = vunpack.c.l.b16 %v285
    %v325 = vunpack.c.l.b16 %v286
    %v326 = vunpack.c.l.b16 %v287
    %v327 = vunpack.c.l.b16 %v288
    %v328 = vunpack.c.l.b16 %v289
    %v329 = vpack.c.b16 %v314, %v313
    %v330 = vpack.c.b16 %v316, %v315
    %v331 = vpack.c.b16 %v318, %v317
    %v332 = vpack.c.b16 %v320, %v319
    %v333 = vpack.c.b16 %v322, %v321
    %v334 = vpack.c.b16 %v324, %v323
    %v335 = vpack.c.b16 %v326, %v325
    %v336 = vpack.c.b16 %v328, %v327
    %345 = vmatprep.subr.bf16.mxu0 0
    %346 = vmatpush1.bf16.msra.mxu0 %v329
    %347 = vmatprep.subr.bf16.mxu0 0
    %348 = vmatpush1.bf16.msra.mxu0 %v330
    %349 = vmatprep.subr.bf16.mxu0 0
    %350 = vmatpush1.bf16.msra.mxu0 %v331
    %351 = vmatprep.subr.bf16.mxu0 0
    %352 = vmatpush1.bf16.msra.mxu0 %v332
    %353 = vmatprep.subr.bf16.mxu0 0
    %354 = vmatpush1.bf16.msra.mxu0 %v333
    %355 = vmatprep.subr.bf16.mxu0 0
    %356 = vmatpush1.bf16.msra.mxu0 %v334
    %357 = vmatprep.subr.bf16.mxu0 0
    %358 = vmatpush1.bf16.msra.mxu0 %v335
    %359 = vmatprep.subr.bf16.mxu0 0
    %360 = vmatpush1.bf16.msra.mxu0 %v336
    %361 = vmatprep.subr.bf16.mxu0 0
    %362 = vmatpush1.bf16.msra.mxu0 0
    %363 = vmatprep.subr.bf16.mxu0 0
    %364 = vmatpush1.bf16.msra.mxu0 0
    %365 = vmatprep.subr.bf16.mxu0 0
    %366 = vmatpush1.bf16.msra.mxu0 0
    %367 = vmatprep.subr.bf16.mxu0 0
    %368 = vmatpush1.bf16.msra.mxu0 0
    %369 = vmatprep.subr.bf16.mxu0 0
    %370 = vmatpush1.bf16.msra.mxu0 0
    %371 = vmatprep.subr.bf16.mxu0 0
    %372 = vmatpush1.bf16.msra.mxu0 0
    %373 = vmatprep.subr.bf16.mxu0 0
    %374 = vmatpush1.bf16.msra.mxu0 0
    %375 = vmatprep.subr.bf16.mxu0 0
    %376 = vmatpush1.bf16.msra.mxu0 0
    %377 = vmatprep.mubr.bf16.mxu0 0
    %378 = vmatmul.mubr.bf16.gmra.mrb[0].mxu0 %v273
    %v379 = vpop.f32.mrb[0].mxu0
    %v380 = vadd.f32 %v295, %v379
    %v381 = vpop.f32.mrb[0].mxu0
    %v382 = vpop.f32.mrb[0].mxu0
    %v383 = vadd.f32 %v295, %v382
    %v384 = vpop.f32.mrb[0].mxu0
    %385 = vdwg.mxu0
    %v386 = vmax.f32 %v380, 0.0
    %v387 = vmax.f32 %v383, 0.0
    %v388 = vpack.c.bf16 %v387, %v386
    %v389 = vld [vmem:[#allocation7] sm:$0xf]
    %v390 = vld [vmem:[#allocation7 + $0x4] sm:$0xf]
    %v391 = vld [vmem:[#allocation7 + $0x8] sm:$0xf]
    %v392 = vld [vmem:[#allocation7 + $0xc] sm:$0xf]
    %v393 = vld [vmem:[#allocation7 + $0x10] sm:$0xf]
    %v394 = vld [vmem:[#allocation7 + $0x14] sm:$0xf]
    %v395 = vld [vmem:[#allocation7 + $0x18] sm:$0xf]
    %v396 = vld [vmem:[#allocation7 + $0x1c] sm:$0xf]
    %v397 = vld [vmem:[#allocation7 + $0x20] sm:$0xf]
    %v398 = vld [vmem:[#allocation7 + $0x24] sm:$0xf]
    %v399 = vld [vmem:[#allocation7 + $0x28] sm:$0xf]
    %v400 = vld [vmem:[#allocation7 + $0x2c] sm:$0xf]
    %v401 = vld [vmem:[#allocation7 + $0x30] sm:$0xf]
    %v402 = vld [vmem:[#allocation7 + $0x34] sm:$0xf]
    %v403 = vld [vmem:[#allocation7 + $0x38] sm:$0xf]
    %v404 = vld [vmem:[#allocation7 + $0x3c] sm:$0xf]
    %v405 = vld [vmem:[#allocation4] sm:$0xf]
    %v406 = vld [vmem:[#allocation4 + $0x4] sm:$0xf]
    %v407 = vld [vmem:[#allocation4 + $0x8] sm:$0xf]
    %v408 = vld [vmem:[#allocation4 + $0xc] sm:$0xf]
    %v409 = vld [vmem:[#allocation4 + $0x10] sm:$0xf]
    %v410 = vld [vmem:[#allocation4 + $0x14] sm:$0xf]
    %v411 = vld [vmem:[#allocation4 + $0x18] sm:$0xf]
    %v412 = vld [vmem:[#allocation4 + $0x1c] sm:$0xf]
    %v413 = vld [vmem:[#allocation4 + $0x20] sm:$0xf]
    %v414 = vld [vmem:[#allocation4 + $0x24] sm:$0xf]
    %v415 = vld [vmem:[#allocation4 + $0x28] sm:$0xf]
    %v416 = vld [vmem:[#allocation4 + $0x2c] sm:$0xf]
    %v417 = vld [vmem:[#allocation4 + $0x30] sm:$0xf]
    %v418 = vld [vmem:[#allocation4 + $0x34] sm:$0xf]
    %v419 = vld [vmem:[#allocation4 + $0x38] sm:$0xf]
    %v420 = vld [vmem:[#allocation4 + $0x3c] sm:$0xf]
    %v437 = vunpack.c.l.b16 %v405
    %v438 = vunpack.c.l.b16 %v406
    %v439 = vunpack.c.l.b16 %v407
    %v440 = vunpack.c.l.b16 %v408
    %v441 = vunpack.c.l.b16 %v409
    %v442 = vunpack.c.l.b16 %v410
    %v443 = vunpack.c.l.b16 %v411
    %v444 = vunpack.c.l.b16 %v412
    %v445 = vunpack.c.l.b16 %v413
    %v446 = vunpack.c.l.b16 %v414
    %v447 = vunpack.c.l.b16 %v415
    %v448 = vunpack.c.l.b16 %v416
    %v449 = vunpack.c.l.b16 %v417
    %v450 = vunpack.c.l.b16 %v418
    %v451 = vunpack.c.l.b16 %v419
    %v452 = vunpack.c.l.b16 %v420
    %v453 = vpack.c.b16 %v438, %v437
    %v454 = vpack.c.b16 %v440, %v439
    %v455 = vpack.c.b16 %v442, %v441
    %v456 = vpack.c.b16 %v444, %v443
    %v457 = vpack.c.b16 %v446, %v445
    %v458 = vpack.c.b16 %v448, %v447
    %v459 = vpack.c.b16 %v450, %v449
    %v460 = vpack.c.b16 %v452, %v451
    %469 = vmatprep.subr.bf16.mxu0 0
    %470 = vmatpush1.bf16.msra.mxu0 %v453
    %471 = vmatprep.subr.bf16.mxu0 0
    %472 = vmatpush1.bf16.msra.mxu0 %v454
    %473 = vmatprep.subr.bf16.mxu0 0
    %474 = vmatpush1.bf16.msra.mxu0 %v455
    %475 = vmatprep.subr.bf16.mxu0 0
    %476 = vmatpush1.bf16.msra.mxu0 %v456
    %477 = vmatprep.subr.bf16.mxu0 0
    %478 = vmatpush1.bf16.msra.mxu0 %v457
    %479 = vmatprep.subr.bf16.mxu0 0
    %480 = vmatpush1.bf16.msra.mxu0 %v458
    %481 = vmatprep.subr.bf16.mxu0 0
    %482 = vmatpush1.bf16.msra.mxu0 %v459
    %483 = vmatprep.subr.bf16.mxu0 0
    %484 = vmatpush1.bf16.msra.mxu0 %v460
    %485 = vmatprep.subr.bf16.mxu0 0
    %486 = vmatpush1.bf16.msra.mxu0 0
    %487 = vmatprep.subr.bf16.mxu0 0
    %488 = vmatpush1.bf16.msra.mxu0 0
    %489 = vmatprep.subr.bf16.mxu0 0
    %490 = vmatpush1.bf16.msra.mxu0 0
    %491 = vmatprep.subr.bf16.mxu0 0
    %492 = vmatpush1.bf16.msra.mxu0 0
    %493 = vmatprep.subr.bf16.mxu0 0
    %494 = vmatpush1.bf16.msra.mxu0 0
    %495 = vmatprep.subr.bf16.mxu0 0
    %496 = vmatpush1.bf16.msra.mxu0 0
    %497 = vmatprep.subr.bf16.mxu0 0
    %498 = vmatpush1.bf16.msra.mxu0 0
    %499 = vmatprep.subr.bf16.mxu0 0
    %500 = vmatpush1.bf16.msra.mxu0 0
    %501 = vmatprep.mubr.bf16.mxu0 0
    %502 = vmatmul.mubr.bf16.gmra.mrb[0].mxu0 %v273
    %v503 = vpop.f32.mrb[0].mxu0
    %v504 = vadd.f32 0.0, %v503
    %v505 = vpop.f32.mrb[0].mxu0
    %v506 = vpop.f32.mrb[0].mxu0
    %v507 = vadd.f32 0.0, %v506
    %v508 = vpop.f32.mrb[0].mxu0
    %509 = vdwg.mxu0
    %v510 = vadd.f32 %v265, %v504
    %v511 = vadd.f32 %v269, %v507
    %v512 = vmax.f32 %v510, 0.0
    %v513 = vmax.f32 %v511, 0.0
    %v514 = vpack.c.bf16 %v513, %v512
    %v515 = vld [vmem:[#allocation6 + $0x4] sm:$0xf]
    %v516 = vld [vmem:[#allocation6 + $0xc] sm:$0xf]
    %v517 = vld [vmem:[#allocation6 + $0x14] sm:$0xf]
    %v518 = vld [vmem:[#allocation6 + $0x1c] sm:$0xf]
    %v519 = vld [vmem:[#allocation6 + $0x24] sm:$0xf]
    %v520 = vld [vmem:[#allocation6 + $0x2c] sm:$0xf]
    %v521 = vld [vmem:[#allocation6 + $0x34] sm:$0xf]
    %v522 = vld [vmem:[#allocation6 + $0x3c] sm:$0xf]
    %v523 = vld [vmem:[#allocation6 + $0x44] sm:$0xf]
    %v524 = vld [vmem:[#allocation6 + $0x4c] sm:$0xf]
    %v525 = vld [vmem:[#allocation6 + $0x54] sm:$0xf]
    %v526 = vld [vmem:[#allocation6 + $0x5c] sm:$0xf]
    %v527 = vld [vmem:[#allocation6 + $0x64] sm:$0xf]
    %v528 = vld [vmem:[#allocation6 + $0x6c] sm:$0xf]
    %v529 = vld [vmem:[#allocation6 + $0x74] sm:$0xf]
    %v530 = vld [vmem:[#allocation6 + $0x7c] sm:$0xf]
    %v531 = vld [vmem:[%s5 + $0x1] sm:$0x1]
    %v533 = vlaneseq
    %v534 = vshrl.u32 %v533, 7
    %v535 = vsub.s32 0, %v534
    %v536 = vrot.slane %v531, %v535
    %v554 = vunpack.c.l.b16 %v515
    %v555 = vunpack.c.l.b16 %v516
    %v556 = vunpack.c.l.b16 %v517
    %v557 = vunpack.c.l.b16 %v518
    %v558 = vunpack.c.l.b16 %v519
    %v559 = vunpack.c.l.b16 %v520
    %v560 = vunpack.c.l.b16 %v521
    %v561 = vunpack.c.l.b16 %v522
    %v562 = vunpack.c.l.b16 %v523
    %v563 = vunpack.c.l.b16 %v524
    %v564 = vunpack.c.l.b16 %v525
    %v565 = vunpack.c.l.b16 %v526
    %v566 = vunpack.c.l.b16 %v527
    %v567 = vunpack.c.l.b16 %v528
    %v568 = vunpack.c.l.b16 %v529
    %v569 = vunpack.c.l.b16 %v530
    %v570 = vpack.c.b16 %v555, %v554
    %v571 = vpack.c.b16 %v557, %v556
    %v572 = vpack.c.b16 %v559, %v558
    %v573 = vpack.c.b16 %v561, %v560
    %v574 = vpack.c.b16 %v563, %v562
    %v575 = vpack.c.b16 %v565, %v564
    %v576 = vpack.c.b16 %v567, %v566
    %v577 = vpack.c.b16 %v569, %v568
    %586 = vmatprep.subr.bf16.mxu0 0
    %587 = vmatpush1.bf16.msra.mxu0 %v570
    %588 = vmatprep.subr.bf16.mxu0 0
    %589 = vmatpush1.bf16.msra.mxu0 %v571
    %590 = vmatprep.subr.bf16.mxu0 0
    %591 = vmatpush1.bf16.msra.mxu0 %v572
    %592 = vmatprep.subr.bf16.mxu0 0
    %593 = vmatpush1.bf16.msra.mxu0 %v573
    %594 = vmatprep.subr.bf16.mxu0 0
    %595 = vmatpush1.bf16.msra.mxu0 %v574
    %596 = vmatprep.subr.bf16.mxu0 0
    %597 = vmatpush1.bf16.msra.mxu0 %v575
    %598 = vmatprep.subr.bf16.mxu0 0
    %599 = vmatpush1.bf16.msra.mxu0 %v576
    %600 = vmatprep.subr.bf16.mxu0 0
    %601 = vmatpush1.bf16.msra.mxu0 %v577
    %602 = vmatprep.subr.bf16.mxu0 0
    %603 = vmatpush1.bf16.msra.mxu0 0
    %604 = vmatprep.subr.bf16.mxu0 0
    %605 = vmatpush1.bf16.msra.mxu0 0
    %606 = vmatprep.subr.bf16.mxu0 0
    %607 = vmatpush1.bf16.msra.mxu0 0
    %608 = vmatprep.subr.bf16.mxu0 0
    %609 = vmatpush1.bf16.msra.mxu0 0
    %610 = vmatprep.subr.bf16.mxu0 0
    %611 = vmatpush1.bf16.msra.mxu0 0
    %612 = vmatprep.subr.bf16.mxu0 0
    %613 = vmatpush1.bf16.msra.mxu0 0
    %614 = vmatprep.subr.bf16.mxu0 0
    %615 = vmatpush1.bf16.msra.mxu0 0
    %616 = vmatprep.subr.bf16.mxu0 0
    %617 = vmatpush1.bf16.msra.mxu0 0
    %618 = vmatprep.mubr.bf16.mxu0 0
    %619 = vmatmul.mubr.bf16.gmra.mrb[0].mxu0 %v514
    %v620 = vpop.f32.mrb[0].mxu0
    %v621 = vadd.f32 %v536, %v620
    %v622 = vpop.f32.mrb[0].mxu0
    %v623 = vpop.f32.mrb[0].mxu0
    %v624 = vadd.f32 %v536, %v623
    %v625 = vpop.f32.mrb[0].mxu0
    %626 = vdwg.mxu0
    %v627 = vmax.f32 %v621, 0.0
    %v628 = vmax.f32 %v624, 0.0
    %v629 = vpack.c.bf16 %v628, %v627
    %v630 = vld [vmem:[#allocation7 + $0x40] sm:$0xf]
    %v631 = vld [vmem:[#allocation7 + $0x44] sm:$0xf]
    %v632 = vld [vmem:[#allocation7 + $0x48] sm:$0xf]
    %v633 = vld [vmem:[#allocation7 + $0x4c] sm:$0xf]
    %v634 = vld [vmem:[#allocation7 + $0x50] sm:$0xf]
    %v635 = vld [vmem:[#allocation7 + $0x54] sm:$0xf]
    %v636 = vld [vmem:[#allocation7 + $0x58] sm:$0xf]
    %v637 = vld [vmem:[#allocation7 + $0x5c] sm:$0xf]
    %v638 = vld [vmem:[#allocation7 + $0x60] sm:$0xf]
    %v639 = vld [vmem:[#allocation7 + $0x64] sm:$0xf]
    %v640 = vld [vmem:[#allocation7 + $0x68] sm:$0xf]
    %v641 = vld [vmem:[#allocation7 + $0x6c] sm:$0xf]
    %v642 = vld [vmem:[#allocation7 + $0x70] sm:$0xf]
    %v643 = vld [vmem:[#allocation7 + $0x74] sm:$0xf]
    %v644 = vld [vmem:[#allocation7 + $0x78] sm:$0xf]
    %v645 = vld [vmem:[#allocation7 + $0x7c] sm:$0xf]
    %v662 = vunpack.c.l.b16 %v630
    %v663 = vunpack.c.l.b16 %v631
    %v664 = vunpack.c.l.b16 %v632
    %v665 = vunpack.c.l.b16 %v633
    %v666 = vunpack.c.l.b16 %v634
    %v667 = vunpack.c.l.b16 %v635
    %v668 = vunpack.c.l.b16 %v636
    %v669 = vunpack.c.l.b16 %v637
    %v670 = vunpack.c.l.b16 %v638
    %v671 = vunpack.c.l.b16 %v639
    %v672 = vunpack.c.l.b16 %v640
    %v673 = vunpack.c.l.b16 %v641
    %v674 = vunpack.c.l.b16 %v642
    %v675 = vunpack.c.l.b16 %v643
    %v676 = vunpack.c.l.b16 %v644
    %v677 = vunpack.c.l.b16 %v645
    %v678 = vpack.c.b16 %v663, %v662
    %v679 = vpack.c.b16 %v665, %v664
    %v680 = vpack.c.b16 %v667, %v666
    %v681 = vpack.c.b16 %v669, %v668
    %v682 = vpack.c.b16 %v671, %v670
    %v683 = vpack.c.b16 %v673, %v672
    %v684 = vpack.c.b16 %v675, %v674
    %v685 = vpack.c.b16 %v677, %v676
    %694 = vmatprep.subr.bf16.mxu0 0
    %695 = vmatpush1.bf16.msra.mxu0 %v678
    %696 = vmatprep.subr.bf16.mxu0 0
    %697 = vmatpush1.bf16.msra.mxu0 %v679
    %698 = vmatprep.subr.bf16.mxu0 0
    %699 = vmatpush1.bf16.msra.mxu0 %v680
    %700 = vmatprep.subr.bf16.mxu0 0
    %701 = vmatpush1.bf16.msra.mxu0 %v681
    %702 = vmatprep.subr.bf16.mxu0 0
    %703 = vmatpush1.bf16.msra.mxu0 %v682
    %704 = vmatprep.subr.bf16.mxu0 0
    %705 = vmatpush1.bf16.msra.mxu0 %v683
    %706 = vmatprep.subr.bf16.mxu0 0
    %707 = vmatpush1.bf16.msra.mxu0 %v684
    %708 = vmatprep.subr.bf16.mxu0 0
    %709 = vmatpush1.bf16.msra.mxu0 %v685
    %710 = vmatprep.subr.bf16.mxu0 0
    %711 = vmatpush1.bf16.msra.mxu0 0
    %712 = vmatprep.subr.bf16.mxu0 0
    %713 = vmatpush1.bf16.msra.mxu0 0
    %714 = vmatprep.subr.bf16.mxu0 0
    %715 = vmatpush1.bf16.msra.mxu0 0
    %716 = vmatprep.subr.bf16.mxu0 0
    %717 = vmatpush1.bf16.msra.mxu0 0
    %718 = vmatprep.subr.bf16.mxu0 0
    %719 = vmatpush1.bf16.msra.mxu0 0
    %720 = vmatprep.subr.bf16.mxu0 0
    %721 = vmatpush1.bf16.msra.mxu0 0
    %722 = vmatprep.subr.bf16.mxu0 0
    %723 = vmatpush1.bf16.msra.mxu0 0
    %724 = vmatprep.subr.bf16.mxu0 0
    %725 = vmatpush1.bf16.msra.mxu0 0
    %726 = vmatprep.mubr.bf16.mxu0 0
    %727 = vmatmul.mubr.bf16.gmra.mrb[0].mxu0 %v629
    %v728 = vpop.f32.mrb[0].mxu0
    %v729 = vadd.f32 0.0, %v728
    %v730 = vpop.f32.mrb[0].mxu0
    %v731 = vpop.f32.mrb[0].mxu0
    %v732 = vadd.f32 0.0, %v731
    %v733 = vpop.f32.mrb[0].mxu0
    %734 = vdwg.mxu0
    %v751 = vunpack.c.l.b16 %v389
    %v752 = vunpack.c.l.b16 %v390
    %v753 = vunpack.c.l.b16 %v391
    %v754 = vunpack.c.l.b16 %v392
    %v755 = vunpack.c.l.b16 %v393
    %v756 = vunpack.c.l.b16 %v394
    %v757 = vunpack.c.l.b16 %v395
    %v758 = vunpack.c.l.b16 %v396
    %v759 = vunpack.c.l.b16 %v397
    %v760 = vunpack.c.l.b16 %v398
    %v761 = vunpack.c.l.b16 %v399
    %v762 = vunpack.c.l.b16 %v400
    %v763 = vunpack.c.l.b16 %v401
    %v764 = vunpack.c.l.b16 %v402
    %v765 = vunpack.c.l.b16 %v403
    %v766 = vunpack.c.l.b16 %v404
    %v767 = vpack.c.b16 %v752, %v751
    %v768 = vpack.c.b16 %v754, %v753
    %v769 = vpack.c.b16 %v756, %v755
    %v770 = vpack.c.b16 %v758, %v757
    %v771 = vpack.c.b16 %v760, %v759
    %v772 = vpack.c.b16 %v762, %v761
    %v773 = vpack.c.b16 %v764, %v763
    %v774 = vpack.c.b16 %v766, %v765
    %783 = vmatprep.subr.bf16.mxu0 0
    %784 = vmatpush1.bf16.msra.mxu0 %v767
    %785 = vmatprep.subr.bf16.mxu0 0
    %786 = vmatpush1.bf16.msra.mxu0 %v768
    %787 = vmatprep.subr.bf16.mxu0 0
    %788 = vmatpush1.bf16.msra.mxu0 %v769
    %789 = vmatprep.subr.bf16.mxu0 0
    %790 = vmatpush1.bf16.msra.mxu0 %v770
    %791 = vmatprep.subr.bf16.mxu0 0
    %792 = vmatpush1.bf16.msra.mxu0 %v771
    %793 = vmatprep.subr.bf16.mxu0 0
    %794 = vmatpush1.bf16.msra.mxu0 %v772
    %795 = vmatprep.subr.bf16.mxu0 0
    %796 = vmatpush1.bf16.msra.mxu0 %v773
    %797 = vmatprep.subr.bf16.mxu0 0
    %798 = vmatpush1.bf16.msra.mxu0 %v774
    %799 = vmatprep.subr.bf16.mxu0 0
    %800 = vmatpush1.bf16.msra.mxu0 0
    %801 = vmatprep.subr.bf16.mxu0 0
    %802 = vmatpush1.bf16.msra.mxu0 0
    %803 = vmatprep.subr.bf16.mxu0 0
    %804 = vmatpush1.bf16.msra.mxu0 0
    %805 = vmatprep.subr.bf16.mxu0 0
    %806 = vmatpush1.bf16.msra.mxu0 0
    %807 = vmatprep.subr.bf16.mxu0 0
    %808 = vmatpush1.bf16.msra.mxu0 0
    %809 = vmatprep.subr.bf16.mxu0 0
    %810 = vmatpush1.bf16.msra.mxu0 0
    %811 = vmatprep.subr.bf16.mxu0 0
    %812 = vmatpush1.bf16.msra.mxu0 0
    %813 = vmatprep.subr.bf16.mxu0 0
    %814 = vmatpush1.bf16.msra.mxu0 0
    %815 = vmatprep.mubr.bf16.mxu0 0
    %816 = vmatmul.mubr.bf16.gmra.mrb[0].mxu0 %v388
    %v817 = vpop.f32.mrb[0].mxu0
    %v818 = vadd.f32 %v729, %v817
    %v819 = vpop.f32.mrb[0].mxu0
    %v820 = vpop.f32.mrb[0].mxu0
    %v821 = vadd.f32 %v732, %v820
    %v822 = vpop.f32.mrb[0].mxu0
    %823 = vdwg.mxu0
    %v824 = vld [vmem:[%s7] sm:$0x1]
    %v826 = vlaneseq
    %v827 = vshrl.u32 %v826, 7
    %v828 = vsub.s32 0, %v827
    %v829 = vrot.slane %v824, %v828
    %v831 = vadd.f32 %v818, %v829
    %v832 = vadd.f32 %v821, %v829
    %v833 = vsel %vm108, %v831, -1e+30
    %v834 = vsel %vm108, %v832, -1e+30
    %835 = vmax.xlane.f32.xlu0 %v833
    %v836 = vpop.xlane.xlu0 %835
    %837 = vmax.xlane.f32.xlu0 %v834
    %v838 = vpop.xlane.xlu0 %837
    %v839 = vsel %vm108, %v836, 0.0
    %v840 = vsel %vm108, %v838, 0.0
    %v841 = vsel %vm111, %v831, -1e+30
    %v842 = vsel %vm111, %v832, -1e+30
    %843 = vmax.xlane.f32.xlu0 %v841
    %v844 = vpop.xlane.xlu0 %843
    %845 = vmax.xlane.f32.xlu0 %v842
    %v846 = vpop.xlane.xlu0 %845
    %v847 = vsel %vm111, %v844, %v839
    %v848 = vsel %vm111, %v846, %v840
    %v849 = vsub.f32 %v831, %v847
    %v850 = vsub.f32 %v832, %v848
    %v851 = vmul.f32 %v849, 1.442695
    %v852 = vpow.pop %v851
    %v853 = vmul.f32 %v850, 1.442695
    %v854 = vpow.pop %v853
    %v855 = vsel %vm110, %v852, 0.0
    %v856 = vsel %vm110, %v854, 0.0
    %v857 = vsel %vm108, %v855, 0.0
    %v858 = vsel %vm108, %v856, 0.0
    %859 = vadd.xlane.f32.xlu0 %v857
    %v860 = vpop.xlane.xlu0 %859
    %861 = vadd.xlane.f32.xlu0 %v858
    %v862 = vpop.xlane.xlu0 %861
    %v863 = vsel %vm108, %v860, 1.0
    %v864 = vsel %vm108, %v862, 1.0
    %v865 = vsel %vm111, %v855, 0.0
    %v866 = vsel %vm111, %v856, 0.0
    %867 = vadd.xlane.f32.xlu0 %v865
    %v868 = vpop.xlane.xlu0 %867
    %869 = vadd.xlane.f32.xlu0 %v866
    %v870 = vpop.xlane.xlu0 %869
    %v871 = vsel %vm111, %v868, %v863
    %v872 = vsel %vm111, %v870, %v864
    %v873 = vrcp.pop %v871
    %v874 = vrcp.pop %v872
    %v875 = vmul.f32 %v855, %v873
    %v876 = vmul.f32 %v856, %v874
    %v877 = vld [vmem:[#allocation9] sm:$0xf]
    %v878 = vld [vmem:[#allocation9 + $0x4] sm:$0xf]
    %v879 = vld [vmem:[#allocation9 + $0x8] sm:$0xf]
    %v880 = vld [vmem:[#allocation9 + $0xc] sm:$0xf]
    %v881 = vld [vmem:[#allocation9 + $0x10] sm:$0xf]
    %v882 = vld [vmem:[#allocation9 + $0x14] sm:$0xf]
    %v883 = vld [vmem:[#allocation9 + $0x18] sm:$0xf]
    %v884 = vld [vmem:[#allocation9 + $0x1c] sm:$0xf]
    %v885 = vld [vmem:[#allocation9 + $0x20] sm:$0xf]
    %v886 = vld [vmem:[#allocation9 + $0x24] sm:$0xf]
    %v887 = vld [vmem:[#allocation9 + $0x28] sm:$0xf]
    %v888 = vld [vmem:[#allocation9 + $0x2c] sm:$0xf]
    %v889 = vld [vmem:[#allocation9 + $0x30] sm:$0xf]
    %v890 = vld [vmem:[#allocation9 + $0x34] sm:$0xf]
    %v891 = vld [vmem:[#allocation9 + $0x38] sm:$0xf]
    %v892 = vld [vmem:[#allocation9 + $0x3c] sm:$0xf]
    %v893 = vld [vmem:[%s9] sm:$0x1]
    %v895 = vlaneseq
    %v896 = vshrl.u32 %v895, 7
    %v897 = vsub.s32 0, %v896
    %v898 = vrot.slane %v893, %v897
    %v916 = vunpack.c.l.b16 %v877
    %v917 = vunpack.c.l.b16 %v878
    %v918 = vunpack.c.l.b16 %v879
    %v919 = vunpack.c.l.b16 %v880
    %v920 = vunpack.c.l.b16 %v881
    %v921 = vunpack.c.l.b16 %v882
    %v922 = vunpack.c.l.b16 %v883
    %v923 = vunpack.c.l.b16 %v884
    %v924 = vunpack.c.l.b16 %v885
    %v925 = vunpack.c.l.b16 %v886
    %v926 = vunpack.c.l.b16 %v887
    %v927 = vunpack.c.l.b16 %v888
    %v928 = vunpack.c.l.b16 %v889
    %v929 = vunpack.c.l.b16 %v890
    %v930 = vunpack.c.l.b16 %v891
    %v931 = vunpack.c.l.b16 %v892
    %v932 = vpack.c.b16 %v917, %v916
    %v933 = vpack.c.b16 %v919, %v918
    %v934 = vpack.c.b16 %v921, %v920
    %v935 = vpack.c.b16 %v923, %v922
    %v936 = vpack.c.b16 %v925, %v924
    %v937 = vpack.c.b16 %v927, %v926
    %v938 = vpack.c.b16 %v929, %v928
    %v939 = vpack.c.b16 %v931, %v930
    %948 = vmatprep.subr.bf16.mxu0 0
    %949 = vmatpush1.bf16.msra.mxu0 %v932
    %950 = vmatprep.subr.bf16.mxu0 0
    %951 = vmatpush1.bf16.msra.mxu0 %v933
    %952 = vmatprep.subr.bf16.mxu0 0
    %953 = vmatpush1.bf16.msra.mxu0 %v934
    %954 = vmatprep.subr.bf16.mxu0 0
    %955 = vmatpush1.bf16.msra.mxu0 %v935
    %956 = vmatprep.subr.bf16.mxu0 0
    %957 = vmatpush1.bf16.msra.mxu0 %v936
    %958 = vmatprep.subr.bf16.mxu0 0
    %959 = vmatpush1.bf16.msra.mxu0 %v937
    %960 = vmatprep.subr.bf16.mxu0 0
    %961 = vmatpush1.bf16.msra.mxu0 %v938
    %962 = vmatprep.subr.bf16.mxu0 0
    %963 = vmatpush1.bf16.msra.mxu0 %v939
    %964 = vmatprep.subr.bf16.mxu0 0
    %965 = vmatpush1.bf16.msra.mxu0 0
    %966 = vmatprep.subr.bf16.mxu0 0
    %967 = vmatpush1.bf16.msra.mxu0 0
    %968 = vmatprep.subr.bf16.mxu0 0
    %969 = vmatpush1.bf16.msra.mxu0 0
    %970 = vmatprep.subr.bf16.mxu0 0
    %971 = vmatpush1.bf16.msra.mxu0 0
    %972 = vmatprep.subr.bf16.mxu0 0
    %973 = vmatpush1.bf16.msra.mxu0 0
    %974 = vmatprep.subr.bf16.mxu0 0
    %975 = vmatpush1.bf16.msra.mxu0 0
    %976 = vmatprep.subr.bf16.mxu0 0
    %977 = vmatpush1.bf16.msra.mxu0 0
    %978 = vmatprep.subr.bf16.mxu0 0
    %979 = vmatpush1.bf16.msra.mxu0 0
    %980 = vmatprep.mubr.bf16.mxu0 0
    %981 = vmatmul.mubr.bf16.gmra.mrb[0].mxu0 %v514
    %v982 = vpop.f32.mrb[0].mxu0
    %v983 = vadd.f32 %v898, %v982
    %v984 = vpop.f32.mrb[0].mxu0
    %v985 = vpop.f32.mrb[0].mxu0
    %v986 = vadd.f32 %v898, %v985
    %v987 = vpop.f32.mrb[0].mxu0
    %988 = vdwg.mxu0
    %v989 = vsel %vm108, %v983, -1e+30
    %v990 = vsel %vm108, %v986, -1e+30
    %991 = vmax.xlane.f32.xlu0 %v989
    %v992 = vpop.xlane.xlu0 %991
    %993 = vmax.xlane.f32.xlu0 %v990
    %v994 = vpop.xlane.xlu0 %993
    %v995 = vsel %vm108, %v992, 0.0
    %v996 = vsel %vm108, %v994, 0.0
    %v997 = vsel %vm111, %v983, -1e+30
    %v998 = vsel %vm111, %v986, -1e+30
    %999 = vmax.xlane.f32.xlu0 %v997
    %v1000 = vpop.xlane.xlu0 %999
    %1001 = vmax.xlane.f32.xlu0 %v998
    %v1002 = vpop.xlane.xlu0 %1001
    %v1003 = vsel %vm111, %v1000, %v995
    %v1004 = vsel %vm111, %v1002, %v996
    %v1005 = vsub.f32 %v983, %v1003
    %v1006 = vsub.f32 %v986, %v1004
    %v1007 = vmul.f32 %v1005, 1.442695
    %v1008 = vpow.pop %v1007
    %v1009 = vmul.f32 %v1006, 1.442695
    %v1010 = vpow.pop %v1009
    %v1011 = vsel %vm110, %v1008, 0.0
    %v1012 = vsel %vm110, %v1010, 0.0
    %v1013 = vsel %vm108, %v1011, 0.0
    %v1014 = vsel %vm108, %v1012, 0.0
    %1015 = vadd.xlane.f32.xlu0 %v1013
    %v1016 = vpop.xlane.xlu0 %1015
    %1017 = vadd.xlane.f32.xlu0 %v1014
    %v1018 = vpop.xlane.xlu0 %1017
    %v1019 = vsel %vm108, %v1016, 1.0
    %v1020 = vsel %vm108, %v1018, 1.0
    %v1021 = vsel %vm111, %v1011, 0.0
    %v1022 = vsel %vm111, %v1012, 0.0
    %1023 = vadd.xlane.f32.xlu0 %v1021
    %v1024 = vpop.xlane.xlu0 %1023
    %1025 = vadd.xlane.f32.xlu0 %v1022
    %v1026 = vpop.xlane.xlu0 %1025
    %v1027 = vsel %vm111, %v1024, %v1019
    %v1028 = vsel %vm111, %v1026, %v1020
    %v1029 = vrcp.pop %v1027
    %v1030 = vrcp.pop %v1028
    %v1031 = vmul.f32 %v1011, %v1029
    %v1032 = vmul.f32 %v1012, %v1030
    %v1033 = vmul.f32 %v1031, 0.5
    %v1034 = vmul.f32 %v1032, 0.5
    %v1035 = vmul.f32 %v875, 0.5
    %v1036 = vmul.f32 %v876, 0.5
    %v1037 = vadd.f32 %v1033, %v1035
    %v1038 = vadd.f32 %v1034, %v1036
    %1039 = vst [vmem:[%s10] sm:$0xff] %v1037
    %1040 = vst [vmem:[%s10 + $0x8] sm:$0xff] %v1038
    // Predicated region
    $region62: #{hmcnf_forward.1} parent=1 // pred_check
      _
    $region63: #{hmcnf_forward.1} parent=1 // pred_check_branch
      %1042 = sbr.rel (0) target = $region65
    $region64: #{hmcnf_forward.1} parent=1 // pred_region
      _
    $region65: #{hmcnf_forward.1} parent=1 // pred_fallthru
      _
    // Predicated region
    $region66: #{hmcnf_forward.1} parent=1 // pred_check
      _
    $region67: #{hmcnf_forward.1} parent=1 // pred_check_branch
      %1044 = sbr.rel (0) target = $region69
    $region68: #{hmcnf_forward.1} parent=1 // pred_region
      _
    $region69: #{hmcnf_forward.1} parent=1 // pred_fallthru
      _
    %1045 = vsyncpa [#allocation3], 1
    %1046 = vsyncpa [#allocation5], 1
    %1047 = vsyncpa [#allocation8], 1

</llo_original>
